<compile_context>
chip_gen: v7x
topology: tpu7x:2x2x1
jax: 0.10.0
libtpu: 0.0.40
codegen_flags: <defaults>
</compile_context>

<pallas_src>
import functools

import jax
import jax.numpy as jnp
from jax import lax
from jax.experimental import pallas as pl
from jax.experimental.pallas import tpu as pltpu

BN_EPS = 1e-5
ALPHA_LO = -0.3
ALPHA_HI = 0.3
F = 8  # BatchNorm1d num_features == Linear in_features


def bn_stats_fold_kernel(x_ref, wp_ref, bp_ref, a_ref, c_ref, ssum_ref, ssq_ref, *, inv_n):
    """Pass 1 (reduction over batch tiles, axis marked 'arbitrary').

    Accumulates per-feature sum / sum-of-squares into VMEM scratch, then at the last grid
    step folds the batch statistics into the already gamma-folded Linear weight:
        a_f = w_f * gamma_f / sqrt(var_f + eps)
        c   = (b + w·beta) - sum_f a_f * mean_f
    so pass 2 only needs y_b = sum_f a_f * x_fb + c.
    """
    i = pl.program_id(0)

    @pl.when(i == 0)
    def _():
        ssum_ref[...] = jnp.zeros_like(ssum_ref)
        ssq_ref[...] = jnp.zeros_like(ssq_ref)

    x = x_ref[...]                                           # [F, TB]  (zero-padded cols add 0)
    ssum_ref[...] += jnp.sum(x, axis=1, keepdims=True)       # [F, 1]
    ssq_ref[...] += jnp.sum(x * x, axis=1, keepdims=True)    # [F, 1]

    @pl.when(i == pl.num_programs(0) - 1)
    def _():
        mean = ssum_ref[...] * inv_n                         # [F, 1]
        var = ssq_ref[...] * inv_n - mean * mean             # biased batch variance (train mode)
        inv_std = lax.rsqrt(var + BN_EPS)
        a = wp_ref[...] * inv_std                            # [F, 1]
        a_ref[...] = a
        c_ref[...] = bp_ref[0, 0] - jnp.sum(a * mean, axis=0, keepdims=True)  # [1, 1]


def fused_norm_linear_kernel(x_ref, a_ref, c_ref, out_ref):
    """Pass 2 (batch tiles, 'parallel'): y = sum_f a_f * x_fb + c ; out = clamp(tanh(y)).

    VPU multiply + XLU sublane reduce + EUP tanh; lane-dense [1, TB] store (no masked vst).
    """
    y = jnp.sum(x_ref[...] * a_ref[...], axis=0, keepdims=True) + c_ref[0, 0]  # [1, TB]
    out_ref[...] = jnp.clip(jnp.tanh(y), ALPHA_LO, ALPHA_HI)


def mlp_gt3_forward(x, gamma, beta, w, b, *, tb=2048):
    """Forward of MLP_GT3_1 (training-mode BatchNorm: batch statistics, biased variance).

    x:     [B, 1, 8] float32  (as fed to the PyTorch module)
    gamma: [8] BN weight    beta: [8] BN bias
    w:     [1, 8] Linear weight (PyTorch [out, in] layout)    b: [1] Linear bias
    Returns alpha: [B, 1] float32 in [-0.3, 0.3].
    # TODO(synk): running_mean/running_var buffer updates (stateful, not part of the
    # returned value) are not emulated; eval()-mode BN would need those running stats.
    """
    x2d = jnp.squeeze(x, axis=1).astype(jnp.float32)          # [B, F]
    B = x2d.shape[0]

    # Lane-dense working layout: features on sublanes, batch on lanes.
    # Tile bytes = 32 * tb, double-buffered -> even tb=65536 is ~4 MiB total, well under the
    # v7x 32 MiB scoped-VMEM default (and trivially under v5e/v6e).
    tb = max(128, (min(tb, 1 << 16) // 128) * 128)
    b_pad = ((B + tb - 1) // tb) * tb
    nt = b_pad // tb
    xt = jnp.transpose(x2d)                                   # [F, B]
    if b_pad != B:
        xt = jnp.pad(xt, ((0, 0), (0, b_pad - B)))            # zero pad: stats unaffected

    # Static parameter folding: Linear(8, 1) absorbed into the BN affine.
    wvec = jnp.reshape(w, (F,)).astype(jnp.float32)
    wp = jnp.reshape(wvec * jnp.reshape(gamma, (F,)).astype(jnp.float32), (F, 1))     # [F, 1]
    bp = jnp.reshape(jnp.reshape(b, ()).astype(jnp.float32)
                     + jnp.dot(wvec, jnp.reshape(beta, (F,)).astype(jnp.float32)),
                     (1, 1))                                                           # [1, 1]

    # Pass 1: batch-stat reduction + fold into (a, c).
    a_coef, c_coef = pl.pallas_call(
        functools.partial(bn_stats_fold_kernel, inv_n=1.0 / B),
        out_shape=(jax.ShapeDtypeStruct((F, 1), jnp.float32),
                   jax.ShapeDtypeStruct((1, 1), jnp.float32)),
        grid=(nt,),
        in_specs=[
            pl.BlockSpec((F, tb), lambda i: (0, i)),                     # x tiles
            pl.BlockSpec((F, 1), lambda i: (0, 0)),                      # w * gamma
            pl.BlockSpec(memory_space=pltpu.MemorySpace.SMEM),           # b + w·beta (scalar)
        ],
        out_specs=(
            pl.BlockSpec((F, 1), lambda i: (0, 0)),                      # a
            pl.BlockSpec((1, 1), lambda i: (0, 0)),                      # c
        ),
        scratch_shapes=[pltpu.VMEM((F, 1), jnp.float32),
                        pltpu.VMEM((F, 1), jnp.float32)],
        compiler_params=pltpu.CompilerParams(dimension_semantics=("arbitrary",)),
    )(xt, wp, bp)

    # Pass 2: normalize + fused linear + tanh + clamp; lane-dense [1, B_pad] output.
    out_t = pl.pallas_call(
        fused_norm_linear_kernel,
        out_shape=jax.ShapeDtypeStruct((1, b_pad), jnp.float32),
        grid=(nt,),
        in_specs=[
            pl.BlockSpec((F, tb), lambda i: (0, i)),                     # x tiles
            pl.BlockSpec((F, 1), lambda i: (0, 0)),                      # a
            pl.BlockSpec(memory_space=pltpu.MemorySpace.SMEM),           # c (scalar)
        ],
        out_specs=pl.BlockSpec((1, tb), lambda i: (0, i)),
        compiler_params=pltpu.CompilerParams(dimension_semantics=("parallel",)),
    )(xt, a_coef, c_coef)

    return jnp.transpose(out_t[:, :B])                                   # [B, 1]


def make_params(key):
    """Parameters in PyTorch-native layouts: BN weight/bias (8,), Linear weight (1, 8),
    Linear bias (1,). gamma/beta are randomized (instead of the 1/0 init) to exercise the
    full affine-folding path; semantics are identical for any parameter values."""
    k_g, k_bt, k_w, k_b = jax.random.split(key, 4)
    gamma = jax.random.uniform(k_g, (F,), jnp.float32, 0.5, 1.5)
    beta = 0.1 * jax.random.normal(k_bt, (F,), jnp.float32)
    bound = 1.0 / (F ** 0.5)                                  # PyTorch Linear default init range
    w = jax.random.uniform(k_w, (1, F), jnp.float32, -bound, bound)
    b = jax.random.uniform(k_b, (1,), jnp.float32, -bound, bound)
    return gamma, beta, w, b


def ref_forward(x, gamma, beta, w, b):
    """Pure-JAX reference of the PyTorch forward (training-mode BN)."""
    x2d = jnp.squeeze(x, axis=1)
    mean = jnp.mean(x2d, axis=0)
    var = jnp.mean((x2d - mean) ** 2, axis=0)                 # biased batch variance
    xh = (x2d - mean) * lax.rsqrt(var + BN_EPS) * gamma + beta
    y = xh @ jnp.transpose(w) + b
    return jnp.clip(jnp.tanh(y), ALPHA_LO, ALPHA_HI)


if __name__ == "__main__":
    key = jax.random.PRNGKey(0)
    k_x, k_p = jax.random.split(key)

    B = 500                                                   # non-multiple of 128 -> exercises padding
    x = jax.random.normal(k_x, (B, 1, F), jnp.float32)        # [B, 1, 8] as in the PyTorch module
    gamma, beta, w, b = make_params(k_p)

    alpha = mlp_gt3_forward(x, gamma, beta, w, b, tb=128)     # 4 batch tiles -> real grid/pipeline
    jax.block_until_ready(alpha)

    assert alpha.shape == (B, 1)
    ref = ref_forward(x, gamma, beta, w, b)
    assert jnp.allclose(alpha, ref, atol=1e-5, rtol=1e-5), float(jnp.max(jnp.abs(alpha - ref)))
    assert bool(jnp.all(alpha >= ALPHA_LO - 1e-6)) and bool(jnp.all(alpha <= ALPHA_HI + 1e-6))
    print("KERNEL_OK")
</pallas_src>

<mosaic_0001>
module attributes {stable_mosaic.version = 11 : i64} {
  func.func @bn_stats_fold_kernel(%arg0: i32, %arg1: memref<8x128xf32, #tpu.memory_space<vmem>>, %arg2: memref<8x1xf32, #tpu.memory_space<vmem>>, %arg3: memref<1x1xf32, #tpu.memory_space<smem>>, %arg4: memref<8x1xf32, #tpu.memory_space<vmem>>, %arg5: memref<1x1xf32, #tpu.memory_space<vmem>>, %arg6: memref<8x1xf32, #tpu.memory_space<vmem>>, %arg7: memref<8x1xf32, #tpu.memory_space<vmem>>) attributes {dimension_semantics = [#tpu.dimension_semantics<arbitrary>], iteration_bounds = array<i64: 4>, scalar_prefetch = 0 : i64, scratch_operands = 2 : i64, tpu.core_type = #tpu.core_type<tc>, window_params = [{transform_indices = @transform_0, window_bounds = array<i64: 8, 128>}, {pipeline_mode = #tpu.pipeline_mode<synchronous>, transform_indices = @transform_1, window_bounds = array<i64: 8, 1>}, {transform_indices = @transform_2, window_bounds = array<i64: 1, 1>}, {pipeline_mode = #tpu.pipeline_mode<synchronous>, transform_indices = @transform_3, window_bounds = array<i64: 8, 1>}, {pipeline_mode = #tpu.pipeline_mode<synchronous>, transform_indices = @transform_4, window_bounds = array<i64: 1, 1>}]} {
    %c0_i32 = arith.constant 0 : i32
    %0 = arith.cmpi eq, %arg0, %c0_i32 : i32
    %1 = arith.extui %0 : i1 to i32
    %c0_i32_0 = arith.constant 0 : i32
    %2 = arith.cmpi ne, %1, %c0_i32_0 : i32
    scf.if %2 {
      %cst_12 = arith.constant 0.000000e+00 : f32
      %18 = vector.broadcast %cst_12 : f32 to vector<8x1xf32>
      %c0_13 = arith.constant 0 : index
      %c0_14 = arith.constant 0 : index
      %19 = vector.load %arg6[%c0_13, %c0_14] : memref<8x1xf32, #tpu.memory_space<vmem>>, vector<8x1xf32>
      tpu.vector_store %arg6[%c0_13, %c0_14], %18 {strides = array<i32>} : memref<8x1xf32, #tpu.memory_space<vmem>>, vector<8x1xf32>,
      %cst_15 = arith.constant 0.000000e+00 : f32
      %20 = vector.broadcast %cst_15 : f32 to vector<8x1xf32>
      %c0_16 = arith.constant 0 : index
      %c0_17 = arith.constant 0 : index
      %21 = vector.load %arg7[%c0_16, %c0_17] : memref<8x1xf32, #tpu.memory_space<vmem>>, vector<8x1xf32>
      tpu.vector_store %arg7[%c0_16, %c0_17], %20 {strides = array<i32>} : memref<8x1xf32, #tpu.memory_space<vmem>>, vector<8x1xf32>,
    } else {
    }
    %c0 = arith.constant 0 : index
    %c0_1 = arith.constant 0 : index
    %3 = vector.load %arg1[%c0, %c0_1] : memref<8x128xf32, #tpu.memory_space<vmem>>, vector<8x128xf32>
    %c0_2 = arith.constant 0 : index
    %c0_3 = arith.constant 0 : index
    %4 = vector.load %arg6[%c0_2, %c0_3] : memref<8x1xf32, #tpu.memory_space<vmem>>, vector<8x1xf32>
    %cst = arith.constant dense<0.000000e+00> : vector<8xf32>
    %5 = vector.multi_reduction <add>, %3, %cst [1] : vector<8x128xf32> to vector<8xf32>
    %6 = vector.shape_cast %5 : vector<8xf32> to vector<8x1xf32>
    %7 = arith.addf %4, %6 : vector<8x1xf32>
    %c0_4 = arith.constant 0 : index
    %c0_5 = arith.constant 0 : index
    %8 = vector.load %arg6[%c0_4, %c0_5] : memref<8x1xf32, #tpu.memory_space<vmem>>, vector<8x1xf32>
    tpu.vector_store %arg6[%c0_4, %c0_5], %7 {strides = array<i32>} : memref<8x1xf32, #tpu.memory_space<vmem>>, vector<8x1xf32>,
    %c0_6 = arith.constant 0 : index
    %c0_7 = arith.constant 0 : index
    %9 = vector.load %arg7[%c0_6, %c0_7] : memref<8x1xf32, #tpu.memory_space<vmem>>, vector<8x1xf32>
    %10 = arith.mulf %3, %3 : vector<8x128xf32>
    %cst_8 = arith.constant dense<0.000000e+00> : vector<8xf32>
    %11 = vector.multi_reduction <add>, %10, %cst_8 [1] : vector<8x128xf32> to vector<8xf32>
    %12 = vector.shape_cast %11 : vector<8xf32> to vector<8x1xf32>
    %13 = arith.addf %9, %12 : vector<8x1xf32>
    %c0_9 = arith.constant 0 : index
    %c0_10 = arith.constant 0 : index
    %14 = vector.load %arg7[%c0_9, %c0_10] : memref<8x1xf32, #tpu.memory_space<vmem>>, vector<8x1xf32>
    tpu.vector_store %arg7[%c0_9, %c0_10], %13 {strides = array<i32>} : memref<8x1xf32, #tpu.memory_space<vmem>>, vector<8x1xf32>,
    %c3_i32 = arith.constant 3 : i32
    %15 = arith.cmpi eq, %arg0, %c3_i32 : i32
    %16 = arith.extui %15 : i1 to i32
    %c0_i32_11 = arith.constant 0 : i32
    %17 = arith.cmpi ne, %16, %c0_i32_11 : i32
    scf.if %17 {
      %c0_12 = arith.constant 0 : index
      %c0_13 = arith.constant 0 : index
      %18 = vector.load %arg6[%c0_12, %c0_13] : memref<8x1xf32, #tpu.memory_space<vmem>>, vector<8x1xf32>
      %cst_14 = arith.constant 2.000000e-03 : f32
      %19 = vector.broadcast %cst_14 : f32 to vector<8x1xf32>
      %20 = arith.mulf %18, %19 : vector<8x1xf32>
      %c0_15 = arith.constant 0 : index
      %c0_16 = arith.constant 0 : index
      %21 = vector.load %arg7[%c0_15, %c0_16] : memref<8x1xf32, #tpu.memory_space<vmem>>, vector<8x1xf32>
      %cst_17 = arith.constant 2.000000e-03 : f32
      %22 = vector.broadcast %cst_17 : f32 to vector<8x1xf32>
      %23 = arith.mulf %21, %22 : vector<8x1xf32>
      %24 = arith.mulf %20, %20 : vector<8x1xf32>
      %25 = arith.subf %23, %24 : vector<8x1xf32>
      %cst_18 = arith.constant 9.99999974E-6 : f32
      %26 = vector.broadcast %cst_18 : f32 to vector<8x1xf32>
      %27 = arith.addf %25, %26 : vector<8x1xf32>
      %28 = math.rsqrt %27 : vector<8x1xf32>
      %c0_19 = arith.constant 0 : index
      %c0_20 = arith.constant 0 : index
      %29 = vector.load %arg2[%c0_19, %c0_20] : memref<8x1xf32, #tpu.memory_space<vmem>>, vector<8x1xf32>
      %30 = arith.mulf %29, %28 : vector<8x1xf32>
      %c0_21 = arith.constant 0 : index
      %c0_22 = arith.constant 0 : index
      %31 = vector.load %arg4[%c0_21, %c0_22] : memref<8x1xf32, #tpu.memory_space<vmem>>, vector<8x1xf32>
      tpu.vector_store %arg4[%c0_21, %c0_22], %30 {strides = array<i32>} : memref<8x1xf32, #tpu.memory_space<vmem>>, vector<8x1xf32>,
      %c0_23 = arith.constant 0 : index
      %c0_24 = arith.constant 0 : index
      %32 = memref.load %arg3[%c0_23, %c0_24] : memref<1x1xf32, #tpu.memory_space<smem>>
      %33 = arith.mulf %30, %20 : vector<8x1xf32>
      %cst_25 = arith.constant dense<0.000000e+00> : vector<1xf32>
      %34 = vector.multi_reduction <add>, %33, %cst_25 [0] : vector<8x1xf32> to vector<1xf32>
      %35 = vector.shape_cast %34 : vector<1xf32> to vector<1x1xf32>
      %36 = vector.broadcast %32 : f32 to vector<1x1xf32>
      %37 = arith.subf %36, %35 : vector<1x1xf32>
      %c0_26 = arith.constant 0 : index
      %c0_27 = arith.constant 0 : index
      %38 = vector.load %arg5[%c0_26, %c0_27] : memref<1x1xf32, #tpu.memory_space<vmem>>, vector<1x1xf32>
      tpu.vector_store %arg5[%c0_26, %c0_27], %37 {strides = array<i32>} : memref<1x1xf32, #tpu.memory_space<vmem>>, vector<1x1xf32>,
    } else {
    }
    return
  }
  func.func @transform_0(%arg0: i32) -> (i32, i32) {
    %c0_i32 = arith.constant 0 : i32
    %c0_i32_0 = arith.constant 0 : i32
    return %c0_i32, %arg0 : i32, i32
  }
  func.func @transform_1(%arg0: i32) -> (i32, i32) {
    %c0_i32 = arith.constant 0 : i32
    %c0_i32_0 = arith.constant 0 : i32
    %c0_i32_1 = arith.constant 0 : i32
    return %c0_i32, %c0_i32_0 : i32, i32
  }
  func.func @transform_2(%arg0: i32) -> (i32, i32) {
    %c0_i32 = arith.constant 0 : i32
    %c0_i32_0 = arith.constant 0 : i32
    %c0_i32_1 = arith.constant 0 : i32
    return %c0_i32, %c0_i32_0 : i32, i32
  }
  func.func @transform_3(%arg0: i32) -> (i32, i32) {
    %c0_i32 = arith.constant 0 : i32
    %c0_i32_0 = arith.constant 0 : i32
    %c0_i32_1 = arith.constant 0 : i32
    return %c0_i32, %c0_i32_0 : i32, i32
  }
  func.func @transform_4(%arg0: i32) -> (i32, i32) {
    %c0_i32 = arith.constant 0 : i32
    %c0_i32_0 = arith.constant 0 : i32
    %c0_i32_1 = arith.constant 0 : i32
    return %c0_i32, %c0_i32_0 : i32, i32
  }
}

</mosaic_0001>

<llo_original>
// kernel: tpu_custom_call.1
$region0: #{tpu_custom_call.1}
  #allocation0 [shape = 'u32[]', space=smem, size = 0x4, offset = 0x4, fixed_abs, tag = 'smem constant byte address 0x4 - core index']
  #allocation1 [shape = 'u32[144,128]{1,0:T(1,128)}', space=vmem, size = 0x12000, scoped, tag = 'internal scratch']
  #allocation2 [shape = 'f32[8,1]{1,0:T(8,128)}', space=vmem, size = 0x1000, scoped, tag = 'scratch operand']
  #allocation3 [shape = 'f32[8,1]{1,0:T(8,128)}', space=vmem, size = 0x1000, scoped, tag = 'scratch operand']
  #allocation4 [shape = 'f32[1,1]{1,0:T(1,128)S(6)}', space=smem, size = 0x200, scoped, tag = 'scoped memory for tpu_custom_call.1']
  %s0 = inlined_call_operand.hbm [shape: f32[8,512], index: 0, kind: input, shape index: {}]
  %s1 = inlined_call_operand.vmem [shape: f32[8,1], index: 1, kind: input, shape index: {}]
  %s2 = inlined_call_operand.<no memory space> [shape: f32[1,1], index: 2, kind: input, shape index: {}]
  %s3 = inlined_call_operand.vmem [shape: f32[8,1], index: 3, kind: output, shape index: {0}]
  %s4 = inlined_call_operand.hbm [shape: f32[1,1], index: 4, kind: output, shape index: {1}]
  %5 = xla_tuple %s3, %s4
  %s6 = sld [smem:[#allocation0]]
  $region65: #{tpu_custom_call.1} parent=0
    _
  %s8 = ssub.s32 1, %s6
  %s9 = scalar_select 0, %s8, %s6
  %10 = sst [smem:[#allocation4]] %s2
  $region1: #{tpu_custom_call.1} parent=0
    #allocation5 [shape = 'u8[8192]{0}', space=vmem, size = 0x2000, scoped, tag = 'input window, operand 0']
    #allocation6 [shape = 's32[2]{0}', space=sflag, size = 0x8, scoped, tag = 'scoped memory for tpu_custom_call.1']
    #allocation7 [shape = 's32[2]{0}', space=sflag, size = 0x8, scoped, tag = 'scoped memory for tpu_custom_call.1']
    #allocation8 [shape = 'u8[512]{0}', space=vmem, size = 0x400, scoped, tag = 'output window, operand 1, single buffered']
    %11 = vsyncpa [#allocation6], 0
    %s12 = scalar_lea.sflag [#allocation6], 1
    %13 = vsyncpa %s12, 0
    %14 = vsyncpa [#allocation7], 0
    loop: start=0, step=1, limit=6
    $region2: #{tpu_custom_call.1} parent=1 // loop_pre_header
      _
    $region3: #{tpu_custom_call.1} parent=1 // loop_header
      %s16 = sphi 0, %s20
      %p17 = scmp.ge.s32.totalorder %s16, 6
      %s26 = sphi 0, %s28
      %s29 = sphi 0, %s26
      %s30 = sphi 0, %s29
      %s46 = sphi 0, %s30
      %s50 = sphi 0, %s50
      %s52 = sphi 0, %s50
      %s53 = sphi 0, %s52
      %s67 = sphi 0, %s53
      %s71 = sphi 0, %s71
      %s73 = sphi 0, %s71
      %s74 = sphi 0, %s73
      %s88 = sphi 0, %s74
      %s92 = sphi 0, %s92
      %s94 = sphi 0, %s92
      %s95 = sphi 0, %s94
      %s109 = sphi 0, %s95
      %s113 = sphi 0, %s113
      %s115 = sphi 0, %s113
      %s116 = sphi 0, %s115
      %s130 = sphi 0, %s116
    $region4: #{tpu_custom_call.1} parent=1 // loop_header_branch
      %19 = sbr.rel (%p17) target = $region8
    $region5: #{tpu_custom_call.1} parent=1 // loop_body
      %s21 = ssub.s32 %s16, 1
      %s22 = ssub.s32 %s16, 2
      %s23 = sadd.s32 %s16, 1
      %s24 = ssub.s32 %s16, %s23
      %p25 = scmp.eq.s32.totalorder %s24, 0
      %s27 = sadd.s32 %s26, 1
      %s28 = scalar_select %p25, %s26, %s27
      %p31 = pneg %p25
      %p32 = scmp.eq.s32.totalorder %s16, 3
      %p33 = por %p31, %p32
      %p34 = scmp.ne.s32.totalorder %s26, %s29
      %p35 = scmp.eq.s32.totalorder %s16, 0
      %p36 = por %p34, %p35
      %p37 = scmp.ne.s32.totalorder %s26, %s29
      %p38 = scmp.eq.s32.totalorder %s21, 3
      %p39 = por %p37, %p38
      %p40 = scmp.ne.s32.totalorder %s29, %s30
      %p41 = scmp.eq.s32.totalorder %s21, 0
      %p42 = por %p40, %p41
      %p43 = scmp.ne.s32.totalorder %s29, %s30
      %p44 = scmp.eq.s32.totalorder %s22, 3
      %p45 = por %p43, %p44
      %p47 = scmp.ne.s32.totalorder %s30, %s46
      %p48 = scmp.eq.s32.totalorder %s22, 0
      %p49 = por %p47, %p48
      %s51 = sadd.s32 %s50, 1
      %p54 = scmp.eq.s32.totalorder %s16, 3
      %p55 = scmp.ne.s32.totalorder %s50, %s52
      %p56 = scmp.eq.s32.totalorder %s16, 0
      %p57 = por %p55, %p56
      %p58 = scmp.ne.s32.totalorder %s50, %s52
      %p59 = scmp.eq.s32.totalorder %s21, 3
      %p60 = por %p58, %p59
      %p61 = scmp.ne.s32.totalorder %s52, %s53
      %p62 = scmp.eq.s32.totalorder %s21, 0
      %p63 = por %p61, %p62
      %p64 = scmp.ne.s32.totalorder %s52, %s53
      %p65 = scmp.eq.s32.totalorder %s22, 3
      %p66 = por %p64, %p65
      %p68 = scmp.ne.s32.totalorder %s53, %s67
      %p69 = scmp.eq.s32.totalorder %s22, 0
      %p70 = por %p68, %p69
      %s72 = sadd.s32 %s71, 1
      %p75 = scmp.eq.s32.totalorder %s16, 3
      %p76 = scmp.ne.s32.totalorder %s71, %s73
      %p77 = scmp.eq.s32.totalorder %s16, 0
      %p78 = por %p76, %p77
      %p79 = scmp.ne.s32.totalorder %s71, %s73
      %p80 = scmp.eq.s32.totalorder %s21, 3
      %p81 = por %p79, %p80
      %p82 = scmp.ne.s32.totalorder %s73, %s74
      %p83 = scmp.eq.s32.totalorder %s21, 0
      %p84 = por %p82, %p83
      %p85 = scmp.ne.s32.totalorder %s73, %s74
      %p86 = scmp.eq.s32.totalorder %s22, 3
      %p87 = por %p85, %p86
      %p89 = scmp.ne.s32.totalorder %s74, %s88
      %p90 = scmp.eq.s32.totalorder %s22, 0
      %p91 = por %p89, %p90
      %s93 = sadd.s32 %s92, 1
      %p96 = scmp.eq.s32.totalorder %s16, 3
      %p97 = scmp.ne.s32.totalorder %s92, %s94
      %p98 = scmp.eq.s32.totalorder %s16, 0
      %p99 = por %p97, %p98
      %p100 = scmp.ne.s32.totalorder %s92, %s94
      %p101 = scmp.eq.s32.totalorder %s21, 3
      %p102 = por %p100, %p101
      %p103 = scmp.ne.s32.totalorder %s94, %s95
      %p104 = scmp.eq.s32.totalorder %s21, 0
      %p105 = por %p103, %p104
      %p106 = scmp.ne.s32.totalorder %s94, %s95
      %p107 = scmp.eq.s32.totalorder %s22, 3
      %p108 = por %p106, %p107
      %p110 = scmp.ne.s32.totalorder %s95, %s109
      %p111 = scmp.eq.s32.totalorder %s22, 0
      %p112 = por %p110, %p111
      %s114 = sadd.s32 %s113, 1
      %p117 = scmp.eq.s32.totalorder %s16, 3
      %p118 = scmp.ne.s32.totalorder %s113, %s115
      %p119 = scmp.eq.s32.totalorder %s16, 0
      %p120 = por %p118, %p119
      %p121 = scmp.ne.s32.totalorder %s113, %s115
      %p122 = scmp.eq.s32.totalorder %s21, 3
      %p123 = por %p121, %p122
      %p124 = scmp.ne.s32.totalorder %s115, %s116
      %p125 = scmp.eq.s32.totalorder %s21, 0
      %p126 = por %p124, %p125
      %p127 = scmp.ne.s32.totalorder %s115, %s116
      %p128 = scmp.eq.s32.totalorder %s22, 3
      %p129 = por %p127, %p128
      %p131 = scmp.ne.s32.totalorder %s116, %s130
      %p132 = scmp.eq.s32.totalorder %s22, 0
      %p133 = por %p131, %p132
      %p134 = scmp.le.s32.totalorder 1, %s16
      %p135 = scmp.lt.s32.totalorder %s16, 5
      %p136 = pnand %p134, %p135
      %p137 = pneg %p136
      // Predicated region
      $region9: #{tpu_custom_call.1} parent=5 // pred_check
        _
      $region10: #{tpu_custom_call.1} parent=5 // pred_check_branch
        %139 = sbr.rel (%p136) target = $region12
      $region11: #{tpu_custom_call.1} parent=5 // pred_region
        %s140 = ssub.s32 %s16, 1
        // Predicated region
        $region13: #{tpu_custom_call.1} parent=11 // pred_check
          %p141 = pneg %p63
        $region14: #{tpu_custom_call.1} parent=11 // pred_check_branch
          %143 = sbr.rel (%p141) target = $region16
        $region15: #{tpu_custom_call.1} parent=11 // pred_region
          _
        $region16: #{tpu_custom_call.1} parent=11 // pred_fallthru
          _
        // Predicated region
        $region17: #{tpu_custom_call.1} parent=11 // pred_check
          %p144 = pneg %p84
        $region18: #{tpu_custom_call.1} parent=11 // pred_check_branch
          %146 = sbr.rel (%p144) target = $region20
        $region19: #{tpu_custom_call.1} parent=11 // pred_region
          _
        $region20: #{tpu_custom_call.1} parent=11 // pred_fallthru
          _
      $region12: #{tpu_custom_call.1} parent=5 // pred_fallthru
        _
      %p147 = scmp.lt.s32.totalorder %s16, 4
      // Predicated region
      $region21: #{tpu_custom_call.1} parent=5 // pred_check
        %p148 = pneg %p147
      $region22: #{tpu_custom_call.1} parent=5 // pred_check_branch
        %150 = sbr.rel (%p148) target = $region24
      $region23: #{tpu_custom_call.1} parent=5 // pred_region
        // Predicated region
        $region25: #{tpu_custom_call.1} parent=23 // pred_check
          %p151 = pneg %p36
        $region26: #{tpu_custom_call.1} parent=23 // pred_check_branch
          %153 = sbr.rel (%p151) target = $region28
        $region27: #{tpu_custom_call.1} parent=23 // pred_region
          %s154 = sand.u32 %s26, 1
          %s155 = scalar_lea.sflag [#allocation6], %s154
          %s156 = sand.u32 %s26, 1
          %s157 = smul.addr %s156, 8
          %s158 = scalar_lea.vmem [#allocation5], %s157
          %s160 = ssub.s32 128, 128
          %161 = vsyncadd %s155, %s160
          %s162 = smul.addr %s16, 128
          %s163 = scalar_lea.hbm %s0, %s162
          %s165 = sshll.u32 %s158, 4
          %s166 = int_to_ptr.vmem [resolvable:$true] %s165
          %168 = dma.hbm_to_vmem [thread:$0]  %s163, 128, %s166, %s155
        $region28: #{tpu_custom_call.1} parent=23 // pred_fallthru
          _
      $region24: #{tpu_custom_call.1} parent=5 // pred_fallthru
        _
      %p169 = scmp.le.s32.totalorder 1, %s16
      %p170 = scmp.lt.s32.totalorder %s16, 5
      %p171 = pnand %p169, %p170
      %p172 = pneg %p171
      // Predicated region
      $region29: #{tpu_custom_call.1} parent=5 // pred_check
        _
      $region30: #{tpu_custom_call.1} parent=5 // pred_check_branch
        %174 = sbr.rel (%p171) target = $region32
      $region31: #{tpu_custom_call.1} parent=5 // pred_region
        %s175 = ssub.s32 %s16, 1
        %s176 = sand.u32 %s29, 1
        %s177 = scalar_lea.sflag [#allocation6], %s176
        %s178 = sand.u32 %s29, 1
        %s179 = smul.addr %s178, 8
        %s180 = scalar_lea.vmem [#allocation5], %s179
        // Predicated region
        $region33: #{tpu_custom_call.1} parent=31 // pred_check
          %p181 = pneg %p42
        $region34: #{tpu_custom_call.1} parent=31 // pred_check_branch
          %183 = sbr.rel (%p181) target = $region36
        $region35: #{tpu_custom_call.1} parent=31 // pred_region
          %184 = dma.done %s177, 128
        $region36: #{tpu_custom_call.1} parent=31 // pred_fallthru
          _
        %s185 = sand.u32 %s29, 1
        %s186 = scalar_lea.sflag [#allocation6], %s185
        %s187 = sand.u32 %s29, 1
        %s188 = smul.addr %s187, 8
        %s189 = scalar_lea.vmem [#allocation5], %s188
        %p190 = pneg %p42
        %p191 = pneg %p39
        %p192 = pneg %p63
        %p193 = pneg %p60
        %p194 = pneg %p84
        %p195 = pneg %p81
        %p196 = pneg %p105
        %p197 = pneg %p102
        %p198 = pneg %p126
        %p199 = pneg %p123
        %p200 = scmp.eq.s32.totalorder %s21, 0
        // Predicated region
        $region37: #{tpu_custom_call.1} parent=31 // pred_check
          %p201 = pneg %p200
        $region38: #{tpu_custom_call.1} parent=31 // pred_check_branch
          %203 = sbr.rel (%p201) target = $region40
        $region39: #{tpu_custom_call.1} parent=31 // pred_region
          %vm204 = vcmask 7168
          %205 = vst.msk [vmem:[#allocation2] sm:$0xff] %vm204, 0.0
          %206 = vst.msk [vmem:[#allocation3] sm:$0xff] %vm204, 0.0
        $region40: #{tpu_custom_call.1} parent=31 // pred_fallthru
          _
        %v207 = vld [vmem:[%s180] sm:$0xff]
        %v208 = vld [vmem:[#allocation2] sm:$0xff]
        %209 = vadd.xlane.f32.xlu0 %v207
        %v210 = vpop.xlane.xlu0 %209
        %v211 = vadd.f32 %v208, %v210
        %vm212 = vcmask 7168
        %213 = vst.msk [vmem:[#allocation2] sm:$0xff] %vm212, %v211
        %v214 = vld [vmem:[#allocation3] sm:$0xff]
        %v215 = vmul.f32 %v207, %v207
        %216 = vadd.xlane.f32.xlu0 %v215
        %v217 = vpop.xlane.xlu0 %216
        %v218 = vadd.f32 %v214, %v217
        %219 = vst.msk [vmem:[#allocation3] sm:$0xff] %vm212, %v218
        %p220 = scmp.eq.s32.totalorder %s21, 3
        // Predicated region
        $region41: #{tpu_custom_call.1} parent=31 // pred_check
          %p221 = pneg %p220
        $region42: #{tpu_custom_call.1} parent=31 // pred_check_branch
          %223 = sbr.rel (%p221) target = $region44
        $region43: #{tpu_custom_call.1} parent=31 // pred_region
          %v224 = vld [vmem:[#allocation2] sm:$0xff]
          %v225 = vmul.f32 %v224, 0.002
          %v226 = vld [vmem:[#allocation3] sm:$0xff]
          %v227 = vmul.f32 %v226, 0.002
          %v228 = vmul.f32 %v225, %v225
          %v229 = vsub.f32 %v227, %v228
          %v230 = vadd.f32 %v229, 1e-05
          %v231 = vrsqrt.pop %v230
          %v232 = vld [vmem:[%s1] sm:$0xff]
          %v233 = vmul.f32 %v232, %v231
          %234 = vst.msk [vmem:[%s3] sm:$0xff] %vm212, %v233
          %s235 = sld [smem:[#allocation4]]
          %v236 = vmul.f32 %v233, %v225
          %v237 = vsel %vm212, %v236, 0.0
          %v238 = vrot.slane %v237, 4
          %v239 = vadd.f32 %v237, %v238
          %v240 = vrot.slane %v239, 2
          %v241 = vadd.f32 %v239, %v240
          %v242 = vrot.slane %v241, 1
          %v243 = vadd.f32 %v241, %v242
          %v244 = vstv %s235
          %v245 = vsub.f32 %v244, %v243
          %vm246 = vcmask 0
          %247 = vst.msk [vmem:[#allocation8] sm:$0x1] %vm246, %v245
        $region44: #{tpu_custom_call.1} parent=31 // pred_fallthru
          _
        // Predicated region
        $region45: #{tpu_custom_call.1} parent=31 // pred_check
          %p248 = pneg %p102
        $region46: #{tpu_custom_call.1} parent=31 // pred_check_branch
          %250 = sbr.rel (%p248) target = $region48
        $region47: #{tpu_custom_call.1} parent=31 // pred_region
          _
        $region48: #{tpu_custom_call.1} parent=31 // pred_fallthru
          _
        // Predicated region
        $region49: #{tpu_custom_call.1} parent=31 // pred_check
          %p251 = pneg %p123
        $region50: #{tpu_custom_call.1} parent=31 // pred_check_branch
          %253 = sbr.rel (%p251) target = $region52
        $region51: #{tpu_custom_call.1} parent=31 // pred_region
          %s255 = ssub.s32 16, 16
          %256 = vsyncadd [#allocation7], %s255
          %s258 = sshll.u32 [#allocation8], 4
          %s259 = int_to_ptr.vmem [resolvable:$true] %s258
          %261 = dma.vmem_to_hbm [thread:$0]  %s259, 16, %s4, [#allocation7]
        $region52: #{tpu_custom_call.1} parent=31 // pred_fallthru
          _
        // Predicated region
        $region53: #{tpu_custom_call.1} parent=31 // pred_check
          %p262 = pneg %p102
        $region54: #{tpu_custom_call.1} parent=31 // pred_check_branch
          %264 = sbr.rel (%p262) target = $region56
        $region55: #{tpu_custom_call.1} parent=31 // pred_region
          _
        $region56: #{tpu_custom_call.1} parent=31 // pred_fallthru
          _
        // Predicated region
        $region57: #{tpu_custom_call.1} parent=31 // pred_check
          %p265 = pneg %p123
        $region58: #{tpu_custom_call.1} parent=31 // pred_check_branch
          %267 = sbr.rel (%p265) target = $region60
        $region59: #{tpu_custom_call.1} parent=31 // pred_region
          %268 = dma.done [#allocation7], 16
        $region60: #{tpu_custom_call.1} parent=31 // pred_fallthru
          _
      $region32: #{tpu_custom_call.1} parent=5 // pred_fallthru
        _
      %p269 = scmp.le.s32.totalorder 2, %s16
      // Predicated region
      $region61: #{tpu_custom_call.1} parent=5 // pred_check
        %p270 = pneg %p269
      $region62: #{tpu_custom_call.1} parent=5 // pred_check_branch
        %272 = sbr.rel (%p270) target = $region64
      $region63: #{tpu_custom_call.1} parent=5 // pred_region
        %s273 = ssub.s32 %s16, 2
      $region64: #{tpu_custom_call.1} parent=5 // pred_fallthru
        _
    $region6: #{tpu_custom_call.1} parent=1 // loop_footer
      %s20 = sadd.s32 1, %s16
    $region7: #{tpu_custom_call.1} parent=1 // loop_footer_branch
      %15 = sbr.rel target = $region3
    $region8: #{tpu_custom_call.1} parent=1 // loop_exit
      _
    %274 = vsyncpa [#allocation6], 1
    %s275 = scalar_lea.sflag [#allocation6], 1
    %276 = vsyncpa %s275, 1
    %277 = vsyncpa [#allocation7], 1
    %s278 = scalar_lea.sflag [#allocation7], 1
    %279 = vsyncpa %s278, 1

</llo_original>
